<compile_context>
chip_gen: v7x
topology: tpu7x:2x2x1
jax: 0.10.0
libtpu: 0.0.40
codegen_flags: <defaults>
</compile_context>

<pallas_src>
import functools

import jax
import jax.numpy as jnp
from jax.experimental import pallas as pl
from jax.experimental.pallas import tpu as pltpu

_LANE = 128


def _sa_kernel(x_ref, p_ref, o_ref):
    # x_ref: (TB, 2, Cpt, hw)   p_ref: (6, Cpt, 1)   o_ref: (TB, Cpt, 2, hw)
    hw = x_ref.shape[-1]
    inv_hw = 1.0 / hw

    for s in range(2):                                   # the two shuffle halves
        x = x_ref[:, s, :, :].astype(jnp.float32)        # (TB, Cpt, hw)
        P = p_ref[3 * s + 0]                             # (Cpt, 1) f32
        Q = p_ref[3 * s + 1]
        R = p_ref[3 * s + 2]

        # Single-pass per-row statistics over the spatial axis (biased, GroupNorm-style).
        mean = jnp.sum(x, axis=-1, keepdims=True) * inv_hw
        mean_sq = jnp.sum(x * x, axis=-1, keepdims=True) * inv_hw
        var = jnp.maximum(mean_sq - mean * mean, 0.0)
        inv_std = jax.lax.rsqrt(var + 1e-5)

        # gate = P*(x-mean)*inv_std + Q*mean + R, reassociated to a*x + bias
        # (2 VPU ops/element instead of 4-5); a/bias are per-row (TB, Cpt, 1).
        a = P * inv_std
        bias = (Q - a) * mean + R
        gate = a * x + bias

        # Post-shuffle channel of pre-shuffle channel (s, t) is 2*t + s, i.e. exactly
        # element [:, t, s, :] of the (b, Cp, 2, hw) output layout (lane-aligned store).
        o_ref[:, :, s, :] = (x * jax.nn.sigmoid(gate)).astype(o_ref.dtype)


def _device_budgets():
    """(per-step input-block data budget, vmem scoped limit) by TPU generation."""
    kind = ""
    try:
        kind = jax.devices()[0].device_kind.lower()
    except Exception:
        pass
    if "v5" in kind:            # v5e: 128 MiB physical VMEM, modest blocks are enough
        return 3 * 1024 * 1024, 48 * 1024 * 1024
    if "v6" in kind:            # v6e: 128 MiB physical VMEM
        return 8 * 1024 * 1024, 64 * 1024 * 1024
    # v7x (64 MiB physical VMEM) or unknown generation: stay conservative.
    return 4 * 1024 * 1024, 48 * 1024 * 1024


def _vmem_step_bytes(tb, cpt, hw, itemsize):
    """Estimated VMEM footprint of one grid step (in/out double-buffered + f32 temps)."""
    lp = pl.cdiv(hw, _LANE) * _LANE                  # lane padding of the spatial axis
    in_buf = tb * 2 * cpt * lp * itemsize            # (TB, 2, Cpt, hw) block, per buffer
    out_buf = tb * cpt * 8 * lp * itemsize           # (TB, Cpt, 2, hw): 2->8 sublane pad
    temps = 3 * tb * cpt * lp * 4                    # f32 x / gate / result live per half
    return 2 * in_buf + 2 * out_buf + temps


def sa_layer_forward(x, params, groups=2):
    b, c, h, w = x.shape
    assert c % (2 * groups) == 0, "channels must be divisible by 2*groups"
    cg = c // (2 * groups)          # channels per half-group (parameter length)
    Cp = c // 2                     # channels per shuffle-half
    hw = h * w
    dtype = x.dtype
    itemsize = jnp.dtype(dtype).itemsize
    sub = {1: 32, 2: 16, 4: 8}.get(itemsize, 8)      # sublane quantum for the I/O dtype

    blk_budget, vmem_limit = _device_budgets()
    vmem_target = int(0.75 * vmem_limit)

    # ---- per-row unified gate parameters (tiny: 6*Cp floats) ------------------------
    cweight = params["cweight"].astype(jnp.float32).reshape(-1)
    cbias = params["cbias"].astype(jnp.float32).reshape(-1)
    sweight = params["sweight"].astype(jnp.float32).reshape(-1)
    sbias = params["sbias"].astype(jnp.float32).reshape(-1)
    gn_w = params["gn_weight"].astype(jnp.float32).reshape(-1)
    gn_b = params["gn_bias"].astype(jnp.float32).reshape(-1)

    t = jnp.arange(Cp)
    k = t % cg                                        # channel index within a branch

    def branch_params(s):
        # pre-shuffle channel pc = s*Cp + t ; branch = ((pc // cg) % 2)
        branch = (s * groups + t // cg) % 2
        is_sp = branch == 1
        P = jnp.where(is_sp, sweight[k] * gn_w[k], 0.0)
        Q = jnp.where(is_sp, 0.0, cweight[k])
        R = jnp.where(is_sp, sweight[k] * gn_b[k] + sbias[k], cbias[k])
        return jnp.stack([P, Q, R], axis=0)           # (3, Cp)

    p = jnp.concatenate([branch_params(0), branch_params(1)], axis=0)[..., None]  # (6,Cp,1)

    # ---- free reshape of the NCHW input; no slicing / copying -----------------------
    xr = x.reshape(b, 2, Cp, hw)

    # ---- channel tile: only when a single batch row would blow the VMEM target ------
    Cpt = Cp
    if Cp % sub == 0 and Cp > sub and _vmem_step_bytes(1, Cp, hw, itemsize) > vmem_target:
        per_ch = _vmem_step_bytes(1, sub, hw, itemsize) / sub
        Cpt = max(sub, min(Cp, int(vmem_target // per_ch) // sub * sub))
    ncp = pl.cdiv(Cp, Cpt)

    # ---- batch tile: biggest TB under both the data budget and the VMEM target ------
    per_b_vmem = _vmem_step_bytes(1, Cpt, hw, itemsize)
    per_b_data = 2 * Cpt * hw * itemsize
    TB = int(max(1, min(b, vmem_target // per_b_vmem, blk_budget // max(1, per_b_data))))
    # Guarantee a few pipelined grid steps (DMA/compute overlap, v7x megacore).
    while TB > 1 and ncp * pl.cdiv(b, TB) < 4:
        TB = max(1, (TB + 1) // 2)
    nb = pl.cdiv(b, TB)                               # ragged last batch tile is fine

    # Batch-1 / tiny-batch inference: manufacture steps by splitting channels.
    if ncp * nb < 4 and Cp % sub == 0 and Cp > sub:
        want = max(1, 4 // max(1, nb))
        cand = max(sub, (Cp // want) // sub * sub)
        if cand < Cpt:
            Cpt = cand
            ncp = pl.cdiv(Cp, Cpt)

    cost = pl.CostEstimate(
        flops=9 * b * c * hw,
        transcendentals=b * c * hw,
        bytes_accessed=2 * b * c * hw * itemsize,
    )

    out = pl.pallas_call(
        _sa_kernel,
        out_shape=jax.ShapeDtypeStruct((b, Cp, 2, hw), dtype),
        grid_spec=pltpu.PrefetchScalarGridSpec(
            num_scalar_prefetch=0,
            grid=(ncp, nb),                            # batch innermost: param block reused
            in_specs=[
                pl.BlockSpec((TB, 2, Cpt, hw), lambda ci, bi: (bi, 0, ci, 0)),
                pl.BlockSpec((6, Cpt, 1), lambda ci, bi: (0, ci, 0)),
            ],
            out_specs=pl.BlockSpec((TB, Cpt, 2, hw), lambda ci, bi: (bi, ci, 0, 0)),
        ),
        compiler_params=pltpu.CompilerParams(
            dimension_semantics=("parallel", "parallel"),
            vmem_limit_bytes=vmem_limit,
        ),
        cost_estimate=cost,
    )(xr, p)

    # Output is already channel-shuffled in memory; this reshape is free.
    return out.reshape(b, c, h, w)


def sa_layer_reference(x, params, groups=2):
    """Pure-JAX mirror of the PyTorch forward, for validation."""
    b, c, h, w = x.shape
    cg = c // (2 * groups)
    xr = x.reshape(b * groups, 2 * cg, h, w)
    x0, x1 = xr[:, :cg], xr[:, cg:]

    cweight = params["cweight"].reshape(1, cg, 1, 1)
    cbias = params["cbias"].reshape(1, cg, 1, 1)
    sweight = params["sweight"].reshape(1, cg, 1, 1)
    sbias = params["sbias"].reshape(1, cg, 1, 1)
    gn_w = params["gn_weight"].reshape(1, cg, 1, 1)
    gn_b = params["gn_bias"].reshape(1, cg, 1, 1)

    xn = jnp.mean(x0, axis=(2, 3), keepdims=True)
    xn = cweight * xn + cbias
    xn = x0 * jax.nn.sigmoid(xn)

    mu = jnp.mean(x1, axis=(2, 3), keepdims=True)
    var = jnp.mean((x1 - mu) ** 2, axis=(2, 3), keepdims=True)
    xs = (x1 - mu) / jnp.sqrt(var + 1e-5)
    xs = gn_w * xs + gn_b
    xs = sweight * xs + sbias
    xs = x1 * jax.nn.sigmoid(xs)

    out = jnp.concatenate([xn, xs], axis=1).reshape(b, c, h, w)
    out = out.reshape(b, 2, c // 2, h, w).transpose(0, 2, 1, 3, 4).reshape(b, c, h, w)
    return out


if __name__ == "__main__":
    groups = 2
    # h=w=14 -> hw=196 (a real CNN spatial size, NOT a multiple of 128): exercises the
    # fused-shuffle path that previously fell back to an XLA transpose.
    b, c, h, w = 2, 16, 14, 14
    cg = c // (2 * groups)

    key = jax.random.PRNGKey(0)
    kx, kp = jax.random.split(key)
    x = jax.random.normal(kx, (b, c, h, w), dtype=jnp.float32)

    # Deterministic synthetic parameters (module init would be zeros/ones; use small
    # random values so the kernel math is actually exercised).
    pk = jax.random.split(kp, 6)
    params = {
        "cweight": 0.1 * jax.random.normal(pk[0], (cg,), jnp.float32),
        "cbias": 1.0 + 0.1 * jax.random.normal(pk[1], (cg,), jnp.float32),
        "sweight": 0.1 * jax.random.normal(pk[2], (cg,), jnp.float32),
        "sbias": 1.0 + 0.1 * jax.random.normal(pk[3], (cg,), jnp.float32),
        "gn_weight": 1.0 + 0.1 * jax.random.normal(pk[4], (cg,), jnp.float32),
        "gn_bias": 0.1 * jax.random.normal(pk[5], (cg,), jnp.float32),
    }

    out = jax.jit(functools.partial(sa_layer_forward, groups=groups))(x, params)
    out = jax.block_until_ready(out)

    ref = sa_layer_reference(x, params, groups=groups)
    assert out.shape == (b, c, h, w)
    max_err = jnp.max(jnp.abs(out - ref))
    assert jnp.allclose(out, ref, atol=1e-4, rtol=1e-4), f"max err {max_err}"
    print("KERNEL_OK")
</pallas_src>

<mosaic_0001>
module attributes {stable_mosaic.version = 11 : i64} {
  func.func @_sa_kernel(%arg0: i32, %arg1: i32, %arg2: memref<1x2x8x196xf32, #tpu.memory_space<vmem>>, %arg3: memref<6x8x1xf32, #tpu.memory_space<vmem>>, %arg4: memref<1x8x2x196xf32, #tpu.memory_space<vmem>>) attributes {dimension_semantics = [#tpu.dimension_semantics<parallel>, #tpu.dimension_semantics<parallel>], iteration_bounds = array<i64: 1, 2>, scalar_prefetch = 0 : i64, scratch_operands = 0 : i64, tpu.core_type = #tpu.core_type<tc>, window_params = [{transform_indices = @transform_0, window_bounds = array<i64: 1, 2, 8, 196>}, {transform_indices = @transform_1, window_bounds = array<i64: 6, 8, 1>}, {transform_indices = @transform_2, window_bounds = array<i64: 1, 8, 2, 196>}]} {
    %c0 = arith.constant 0 : index
    %c0_0 = arith.constant 0 : index
    %c0_1 = arith.constant 0 : index
    %c0_2 = arith.constant 0 : index
    %0 = vector.load %arg2[%c0, %c0_0, %c0_1, %c0_2] : memref<1x2x8x196xf32, #tpu.memory_space<vmem>>, vector<1x1x8x196xf32>
    %1 = vector.shape_cast %0 : vector<1x1x8x196xf32> to vector<1x8x196xf32>
    %c0_3 = arith.constant 0 : index
    %c0_4 = arith.constant 0 : index
    %c0_5 = arith.constant 0 : index
    %2 = vector.load %arg3[%c0_3, %c0_4, %c0_5] : memref<6x8x1xf32, #tpu.memory_space<vmem>>, vector<1x8x1xf32>
    %3 = vector.shape_cast %2 : vector<1x8x1xf32> to vector<8x1xf32>
    %c1 = arith.constant 1 : index
    %c0_6 = arith.constant 0 : index
    %c0_7 = arith.constant 0 : index
    %4 = vector.load %arg3[%c1, %c0_6, %c0_7] : memref<6x8x1xf32, #tpu.memory_space<vmem>>, vector<1x8x1xf32>
    %5 = vector.shape_cast %4 : vector<1x8x1xf32> to vector<8x1xf32>
    %c2 = arith.constant 2 : index
    %c0_8 = arith.constant 0 : index
    %c0_9 = arith.constant 0 : index
    %6 = vector.load %arg3[%c2, %c0_8, %c0_9] : memref<6x8x1xf32, #tpu.memory_space<vmem>>, vector<1x8x1xf32>
    %7 = vector.shape_cast %6 : vector<1x8x1xf32> to vector<8x1xf32>
    %cst = arith.constant dense<0.000000e+00> : vector<1x8xf32>
    %8 = vector.multi_reduction <add>, %1, %cst [2] : vector<1x8x196xf32> to vector<1x8xf32>
    %9 = vector.shape_cast %8 : vector<1x8xf32> to vector<1x8x1xf32>
    %cst_10 = arith.constant 0.00510204071 : f32
    %10 = vector.broadcast %cst_10 : f32 to vector<1x8x1xf32>
    %11 = arith.mulf %9, %10 : vector<1x8x1xf32>
    %12 = arith.mulf %1, %1 : vector<1x8x196xf32>
    %cst_11 = arith.constant dense<0.000000e+00> : vector<1x8xf32>
    %13 = vector.multi_reduction <add>, %12, %cst_11 [2] : vector<1x8x196xf32> to vector<1x8xf32>
    %14 = vector.shape_cast %13 : vector<1x8xf32> to vector<1x8x1xf32>
    %cst_12 = arith.constant 0.00510204071 : f32
    %15 = vector.broadcast %cst_12 : f32 to vector<1x8x1xf32>
    %16 = arith.mulf %14, %15 : vector<1x8x1xf32>
    %17 = arith.mulf %11, %11 : vector<1x8x1xf32>
    %18 = arith.subf %16, %17 : vector<1x8x1xf32>
    %cst_13 = arith.constant 0.000000e+00 : f32
    %19 = vector.broadcast %cst_13 : f32 to vector<1x8x1xf32>
    %20 = arith.maximumf %18, %19 : vector<1x8x1xf32>
    %cst_14 = arith.constant 9.99999974E-6 : f32
    %21 = vector.broadcast %cst_14 : f32 to vector<1x8x1xf32>
    %22 = arith.addf %20, %21 : vector<1x8x1xf32>
    %23 = math.rsqrt %22 : vector<1x8x1xf32>
    %24 = vector.shape_cast %3 : vector<8x1xf32> to vector<1x8x1xf32>
    %25 = arith.mulf %24, %23 : vector<1x8x1xf32>
    %26 = vector.shape_cast %5 : vector<8x1xf32> to vector<1x8x1xf32>
    %27 = arith.subf %26, %25 : vector<1x8x1xf32>
    %28 = arith.mulf %27, %11 : vector<1x8x1xf32>
    %29 = vector.shape_cast %7 : vector<8x1xf32> to vector<1x8x1xf32>
    %30 = arith.addf %28, %29 : vector<1x8x1xf32>
    %31 = vector.broadcast %25 : vector<1x8x1xf32> to vector<1x8x196xf32>
    %32 = arith.mulf %31, %1 : vector<1x8x196xf32>
    %33 = vector.broadcast %30 : vector<1x8x1xf32> to vector<1x8x196xf32>
    %34 = arith.addf %32, %33 : vector<1x8x196xf32>
    %35 = arith.negf %34 : vector<1x8x196xf32>
    %36 = math.exp %35 : vector<1x8x196xf32>
    %cst_15 = arith.constant 1.000000e+00 : f32
    %37 = vector.broadcast %cst_15 : f32 to vector<1x8x196xf32>
    %38 = arith.addf %37, %36 : vector<1x8x196xf32>
    %39 = arith.divf %37, %38 : vector<1x8x196xf32>
    %40 = arith.mulf %1, %39 : vector<1x8x196xf32>
    %c0_16 = arith.constant 0 : index
    %c0_17 = arith.constant 0 : index
    %c0_18 = arith.constant 0 : index
    %c0_19 = arith.constant 0 : index
    %41 = vector.load %arg4[%c0_16, %c0_17, %c0_18, %c0_19] : memref<1x8x2x196xf32, #tpu.memory_space<vmem>>, vector<1x8x1x196xf32>
    %42 = vector.shape_cast %41 : vector<1x8x1x196xf32> to vector<1x8x196xf32>
    %43 = vector.shape_cast %40 : vector<1x8x196xf32> to vector<1x8x1x196xf32>
    tpu.vector_store %arg4[%c0_16, %c0_17, %c0_18, %c0_19], %43 {strides = array<i32>} : memref<1x8x2x196xf32, #tpu.memory_space<vmem>>, vector<1x8x1x196xf32>,
    %c0_20 = arith.constant 0 : index
    %c1_21 = arith.constant 1 : index
    %c0_22 = arith.constant 0 : index
    %c0_23 = arith.constant 0 : index
    %44 = vector.load %arg2[%c0_20, %c1_21, %c0_22, %c0_23] : memref<1x2x8x196xf32, #tpu.memory_space<vmem>>, vector<1x1x8x196xf32>
    %45 = vector.shape_cast %44 : vector<1x1x8x196xf32> to vector<1x8x196xf32>
    %c3 = arith.constant 3 : index
    %c0_24 = arith.constant 0 : index
    %c0_25 = arith.constant 0 : index
    %46 = vector.load %arg3[%c3, %c0_24, %c0_25] : memref<6x8x1xf32, #tpu.memory_space<vmem>>, vector<1x8x1xf32>
    %47 = vector.shape_cast %46 : vector<1x8x1xf32> to vector<8x1xf32>
    %c4 = arith.constant 4 : index
    %c0_26 = arith.constant 0 : index
    %c0_27 = arith.constant 0 : index
    %48 = vector.load %arg3[%c4, %c0_26, %c0_27] : memref<6x8x1xf32, #tpu.memory_space<vmem>>, vector<1x8x1xf32>
    %49 = vector.shape_cast %48 : vector<1x8x1xf32> to vector<8x1xf32>
    %c5 = arith.constant 5 : index
    %c0_28 = arith.constant 0 : index
    %c0_29 = arith.constant 0 : index
    %50 = vector.load %arg3[%c5, %c0_28, %c0_29] : memref<6x8x1xf32, #tpu.memory_space<vmem>>, vector<1x8x1xf32>
    %51 = vector.shape_cast %50 : vector<1x8x1xf32> to vector<8x1xf32>
    %cst_30 = arith.constant dense<0.000000e+00> : vector<1x8xf32>
    %52 = vector.multi_reduction <add>, %45, %cst_30 [2] : vector<1x8x196xf32> to vector<1x8xf32>
    %53 = vector.shape_cast %52 : vector<1x8xf32> to vector<1x8x1xf32>
    %cst_31 = arith.constant 0.00510204071 : f32
    %54 = vector.broadcast %cst_31 : f32 to vector<1x8x1xf32>
    %55 = arith.mulf %53, %54 : vector<1x8x1xf32>
    %56 = arith.mulf %45, %45 : vector<1x8x196xf32>
    %cst_32 = arith.constant dense<0.000000e+00> : vector<1x8xf32>
    %57 = vector.multi_reduction <add>, %56, %cst_32 [2] : vector<1x8x196xf32> to vector<1x8xf32>
    %58 = vector.shape_cast %57 : vector<1x8xf32> to vector<1x8x1xf32>
    %cst_33 = arith.constant 0.00510204071 : f32
    %59 = vector.broadcast %cst_33 : f32 to vector<1x8x1xf32>
    %60 = arith.mulf %58, %59 : vector<1x8x1xf32>
    %61 = arith.mulf %55, %55 : vector<1x8x1xf32>
    %62 = arith.subf %60, %61 : vector<1x8x1xf32>
    %cst_34 = arith.constant 0.000000e+00 : f32
    %63 = vector.broadcast %cst_34 : f32 to vector<1x8x1xf32>
    %64 = arith.maximumf %62, %63 : vector<1x8x1xf32>
    %cst_35 = arith.constant 9.99999974E-6 : f32
    %65 = vector.broadcast %cst_35 : f32 to vector<1x8x1xf32>
    %66 = arith.addf %64, %65 : vector<1x8x1xf32>
    %67 = math.rsqrt %66 : vector<1x8x1xf32>
    %68 = vector.shape_cast %47 : vector<8x1xf32> to vector<1x8x1xf32>
    %69 = arith.mulf %68, %67 : vector<1x8x1xf32>
    %70 = vector.shape_cast %49 : vector<8x1xf32> to vector<1x8x1xf32>
    %71 = arith.subf %70, %69 : vector<1x8x1xf32>
    %72 = arith.mulf %71, %55 : vector<1x8x1xf32>
    %73 = vector.shape_cast %51 : vector<8x1xf32> to vector<1x8x1xf32>
    %74 = arith.addf %72, %73 : vector<1x8x1xf32>
    %75 = vector.broadcast %69 : vector<1x8x1xf32> to vector<1x8x196xf32>
    %76 = arith.mulf %75, %45 : vector<1x8x196xf32>
    %77 = vector.broadcast %74 : vector<1x8x1xf32> to vector<1x8x196xf32>
    %78 = arith.addf %76, %77 : vector<1x8x196xf32>
    %79 = arith.negf %78 : vector<1x8x196xf32>
    %80 = math.exp %79 : vector<1x8x196xf32>
    %cst_36 = arith.constant 1.000000e+00 : f32
    %81 = vector.broadcast %cst_36 : f32 to vector<1x8x196xf32>
    %82 = arith.addf %81, %80 : vector<1x8x196xf32>
    %83 = arith.divf %81, %82 : vector<1x8x196xf32>
    %84 = arith.mulf %45, %83 : vector<1x8x196xf32>
    %c0_37 = arith.constant 0 : index
    %c0_38 = arith.constant 0 : index
    %c1_39 = arith.constant 1 : index
    %c0_40 = arith.constant 0 : index
    %85 = vector.load %arg4[%c0_37, %c0_38, %c1_39, %c0_40] : memref<1x8x2x196xf32, #tpu.memory_space<vmem>>, vector<1x8x1x196xf32>
    %86 = vector.shape_cast %85 : vector<1x8x1x196xf32> to vector<1x8x196xf32>
    %87 = vector.shape_cast %84 : vector<1x8x196xf32> to vector<1x8x1x196xf32>
    tpu.vector_store %arg4[%c0_37, %c0_38, %c1_39, %c0_40], %87 {strides = array<i32>} : memref<1x8x2x196xf32, #tpu.memory_space<vmem>>, vector<1x8x1x196xf32>,
    return
  }
  func.func @transform_0(%arg0: i32, %arg1: i32) -> (i32, i32, i32, i32) {
    %c0_i32 = arith.constant 0 : i32
    %c0_i32_0 = arith.constant 0 : i32
    %c0_i32_1 = arith.constant 0 : i32
    return %arg1, %c0_i32, %arg0, %c0_i32_0 : i32, i32, i32, i32
  }
  func.func @transform_1(%arg0: i32, %arg1: i32) -> (i32, i32, i32) {
    %c0_i32 = arith.constant 0 : i32
    %c0_i32_0 = arith.constant 0 : i32
    %c0_i32_1 = arith.constant 0 : i32
    return %c0_i32, %arg0, %c0_i32_0 : i32, i32, i32
  }
  func.func @transform_2(%arg0: i32, %arg1: i32) -> (i32, i32, i32, i32) {
    %c0_i32 = arith.constant 0 : i32
    %c0_i32_0 = arith.constant 0 : i32
    %c0_i32_1 = arith.constant 0 : i32
    return %arg1, %arg0, %c0_i32, %c0_i32_0 : i32, i32, i32, i32
  }
}

</mosaic_0001>

<llo_original>
// kernel: sa_layer_forward.1
$region0: #{sa_layer_forward.1}
  #allocation0 [shape = 'u32[]', space=smem, size = 0x4, offset = 0x4, fixed_abs, tag = 'smem constant byte address 0x4 - core index']
  #allocation1 [shape = 'u32[144,128]{1,0:T(1,128)}', space=vmem, size = 0x12000, scoped, tag = 'internal scratch']
  %s0 = inlined_call_operand.vmem [shape: f32[2,2,8,196], index: 0, kind: input, shape index: {}]
  %s1 = inlined_call_operand.vmem [shape: f32[6,8,1], index: 1, kind: input, shape index: {}]
  %s2 = inlined_call_operand.vmem [shape: f32[2,8,2,196], index: 2, kind: output, shape index: {}]
  %s3 = sld [smem:[#allocation0]]
  $region41: #{sa_layer_forward.1} parent=0
    _
  %s5 = ssub.s32 1, %s3
  %s6 = scalar_select 0, %s5, %s3
  loop: start=0, step=1, limit=4
  $region2: #{sa_layer_forward.1} parent=0 // loop_pre_header
    _
  $region3: #{sa_layer_forward.1} parent=0 // loop_header
    %s8 = sphi 0, %s12
    %p9 = scmp.ge.s32.totalorder %s8, 4
    %s15 = sphi 0, %s27
    %s16 = sphi 0, %s23
    %s17 = sphi 0, %s15
    %s18 = sphi 0, %s16
    %s19 = sphi 0, %s17
    %s20 = sphi 0, %s18
    %s32 = sphi 0, %s34
    %s35 = sphi 0, %s32
    %s36 = sphi 0, %s35
    %s52 = sphi 0, %s36
    %s58 = sphi 0, %s60
    %s61 = sphi 0, %s58
    %s62 = sphi 0, %s61
    %s78 = sphi 0, %s62
    %s86 = sphi 0, %s88
    %s89 = sphi 0, %s86
    %s90 = sphi 0, %s89
    %s106 = sphi 0, %s90
  $region4: #{sa_layer_forward.1} parent=0 // loop_header_branch
    %11 = sbr.rel (%p9) target = $region8
  $region5: #{sa_layer_forward.1} parent=0 // loop_body
    %s13 = ssub.s32 %s8, 1
    %s14 = ssub.s32 %s8, 2
    %s21 = sadd.s32 1, %s16
    %p22 = scmp.ge.s32.totalorder %s21, 2
    %s23 = scalar_select %p22, 0, %s21
    %s24 = sadd.s32 1, %s15
    %s25 = scalar_select %p22, %s24, %s15
    %p26 = scmp.ge.s32.totalorder %s25, 1
    %s27 = scalar_select %p26, 0, %s25
    %s28 = ssub.s32 %s16, %s23
    %s29 = ssub.s32 %s15, %s27
    %s30 = sor.u32 %s28, %s29
    %p31 = scmp.eq.s32.totalorder %s30, 0
    %s33 = sadd.s32 %s32, 1
    %s34 = scalar_select %p31, %s32, %s33
    %p37 = pneg %p31
    %p38 = scmp.eq.s32.totalorder %s8, 1
    %p39 = por %p37, %p38
    %p40 = scmp.ne.s32.totalorder %s32, %s35
    %p41 = scmp.eq.s32.totalorder %s8, 0
    %p42 = por %p40, %p41
    %p43 = scmp.ne.s32.totalorder %s32, %s35
    %p44 = scmp.eq.s32.totalorder %s13, 1
    %p45 = por %p43, %p44
    %p46 = scmp.ne.s32.totalorder %s35, %s36
    %p47 = scmp.eq.s32.totalorder %s13, 0
    %p48 = por %p46, %p47
    %p49 = scmp.ne.s32.totalorder %s35, %s36
    %p50 = scmp.eq.s32.totalorder %s14, 1
    %p51 = por %p49, %p50
    %p53 = scmp.ne.s32.totalorder %s36, %s52
    %p54 = scmp.eq.s32.totalorder %s14, 0
    %p55 = por %p53, %p54
    %s56 = ssub.s32 %s15, %s27
    %p57 = scmp.eq.s32.totalorder %s56, 0
    %s59 = sadd.s32 %s58, 1
    %s60 = scalar_select %p57, %s58, %s59
    %p63 = pneg %p57
    %p64 = scmp.eq.s32.totalorder %s8, 1
    %p65 = por %p63, %p64
    %p66 = scmp.ne.s32.totalorder %s58, %s61
    %p67 = scmp.eq.s32.totalorder %s8, 0
    %p68 = por %p66, %p67
    %p69 = scmp.ne.s32.totalorder %s58, %s61
    %p70 = scmp.eq.s32.totalorder %s13, 1
    %p71 = por %p69, %p70
    %p72 = scmp.ne.s32.totalorder %s61, %s62
    %p73 = scmp.eq.s32.totalorder %s13, 0
    %p74 = por %p72, %p73
    %p75 = scmp.ne.s32.totalorder %s61, %s62
    %p76 = scmp.eq.s32.totalorder %s14, 1
    %p77 = por %p75, %p76
    %p79 = scmp.ne.s32.totalorder %s62, %s78
    %p80 = scmp.eq.s32.totalorder %s14, 0
    %p81 = por %p79, %p80
    %s82 = ssub.s32 %s16, %s23
    %s83 = ssub.s32 %s15, %s27
    %s84 = sor.u32 %s82, %s83
    %p85 = scmp.eq.s32.totalorder %s84, 0
    %s87 = sadd.s32 %s86, 1
    %s88 = scalar_select %p85, %s86, %s87
    %p91 = pneg %p85
    %p92 = scmp.eq.s32.totalorder %s8, 1
    %p93 = por %p91, %p92
    %p94 = scmp.ne.s32.totalorder %s86, %s89
    %p95 = scmp.eq.s32.totalorder %s8, 0
    %p96 = por %p94, %p95
    %p97 = scmp.ne.s32.totalorder %s86, %s89
    %p98 = scmp.eq.s32.totalorder %s13, 1
    %p99 = por %p97, %p98
    %p100 = scmp.ne.s32.totalorder %s89, %s90
    %p101 = scmp.eq.s32.totalorder %s13, 0
    %p102 = por %p100, %p101
    %p103 = scmp.ne.s32.totalorder %s89, %s90
    %p104 = scmp.eq.s32.totalorder %s14, 1
    %p105 = por %p103, %p104
    %p107 = scmp.ne.s32.totalorder %s90, %s106
    %p108 = scmp.eq.s32.totalorder %s14, 0
    %p109 = por %p107, %p108
    %p110 = scmp.le.s32.totalorder 1, %s8
    %p111 = scmp.lt.s32.totalorder %s8, 3
    %p112 = pnand %p110, %p111
    %p113 = pneg %p112
    // Predicated region
    $region9: #{sa_layer_forward.1} parent=5 // pred_check
      _
    $region10: #{sa_layer_forward.1} parent=5 // pred_check_branch
      %115 = sbr.rel (%p112) target = $region12
    $region11: #{sa_layer_forward.1} parent=5 // pred_region
      %s116 = ssub.s32 %s8, 1
      // Predicated region
      $region13: #{sa_layer_forward.1} parent=11 // pred_check
        %p117 = pneg %p74
      $region14: #{sa_layer_forward.1} parent=11 // pred_check_branch
        %119 = sbr.rel (%p117) target = $region16
      $region15: #{sa_layer_forward.1} parent=11 // pred_region
        %p120 = scmp.lt.s32.totalorder %s17, 0
        %s121 = scalar_select %p120, %s17, 0
        %s122 = smul.addr %s121, 8
        %s123 = scalar_lea.vmem %s1, %s122
      $region16: #{sa_layer_forward.1} parent=11 // pred_fallthru
        _
    $region12: #{sa_layer_forward.1} parent=5 // pred_fallthru
      _
    %p124 = scmp.lt.s32.totalorder %s8, 2
    // Predicated region
    $region17: #{sa_layer_forward.1} parent=5 // pred_check
      %p125 = pneg %p124
    $region18: #{sa_layer_forward.1} parent=5 // pred_check_branch
      %127 = sbr.rel (%p125) target = $region20
    $region19: #{sa_layer_forward.1} parent=5 // pred_region
      // Predicated region
      $region21: #{sa_layer_forward.1} parent=19 // pred_check
        %p128 = pneg %p42
      $region22: #{sa_layer_forward.1} parent=19 // pred_check_branch
        %130 = sbr.rel (%p128) target = $region24
      $region23: #{sa_layer_forward.1} parent=19 // pred_region
        %p131 = scmp.lt.s32.totalorder %s16, 1
        %s132 = scalar_select %p131, %s16, 1
        %p133 = scmp.lt.s32.totalorder %s15, 0
        %s134 = scalar_select %p133, %s15, 0
        %s135 = smul.addr %s134, 2
        %s136 = smul.addr %s132, 4
        %s137 = sadd.s32 %s135, %s136
        %s138 = smul.addr %s137, 8
        %s139 = scalar_lea.vmem %s0, %s138
      $region24: #{sa_layer_forward.1} parent=19 // pred_fallthru
        _
    $region20: #{sa_layer_forward.1} parent=5 // pred_fallthru
      _
    %p140 = scmp.le.s32.totalorder 1, %s8
    %p141 = scmp.lt.s32.totalorder %s8, 3
    %p142 = pnand %p140, %p141
    %p143 = pneg %p142
    // Predicated region
    $region25: #{sa_layer_forward.1} parent=5 // pred_check
      _
    $region26: #{sa_layer_forward.1} parent=5 // pred_check_branch
      %145 = sbr.rel (%p142) target = $region28
    $region27: #{sa_layer_forward.1} parent=5 // pred_region
      %s146 = ssub.s32 %s8, 1
      %p147 = scmp.lt.s32.totalorder %s18, 1
      %s148 = scalar_select %p147, %s18, 1
      %p149 = scmp.lt.s32.totalorder %s17, 0
      %s150 = scalar_select %p149, %s17, 0
      %s151 = smul.addr %s150, 2
      %s152 = smul.addr %s148, 4
      %s153 = sadd.s32 %s151, %s152
      %s154 = smul.addr %s153, 8
      %s155 = scalar_lea.vmem %s0, %s154
      %p156 = pneg %p48
      %p157 = pneg %p45
      %p158 = scmp.lt.s32.totalorder %s17, 0
      %s159 = scalar_select %p158, %s17, 0
      %s160 = smul.addr %s159, 8
      %s161 = scalar_lea.vmem %s1, %s160
      %p162 = pneg %p74
      %p163 = pneg %p71
      %p164 = pneg %p102
      %p165 = pneg %p99
      %s166 = smul.u32 8, %s17
      %p167 = scmp.lt.s32.totalorder %s18, 1
      %s168 = scalar_select %p167, %s18, 1
      %p169 = scmp.lt.s32.totalorder %s166, 7
      %s170 = scalar_select %p169, %s166, 7
      %s171 = smul.addr %s170, 2
      %s172 = smul.addr %s168, 16
      %s173 = sadd.s32 %s171, %s172
      %s174 = smul.addr %s173, 2
      %s175 = scalar_lea.vmem %s2, %s174
      %p176 = scmp.lt.s32.totalorder %s18, 1
      %s177 = scalar_select %p176, %s18, 1
      %p178 = scmp.lt.s32.totalorder %s17, 0
      %s179 = scalar_select %p178, %s17, 0
      %s180 = smul.addr %s179, 2
      %s181 = smul.addr %s177, 4
      %s182 = sadd.s32 %s180, %s181
      %s183 = smul.addr %s182, 8
      %s184 = scalar_lea.vmem %s0, %s183
      %p185 = scmp.lt.s32.totalorder %s17, 0
      %s186 = scalar_select %p185, %s17, 0
      %s187 = smul.addr %s186, 8
      %s188 = scalar_lea.vmem %s1, %s187
      %s189 = smul.u32 8, %s17
      %p190 = scmp.lt.s32.totalorder %s18, 1
      %s191 = scalar_select %p190, %s18, 1
      %p192 = scmp.lt.s32.totalorder %s189, 7
      %s193 = scalar_select %p192, %s189, 7
      %s194 = smul.addr %s193, 2
      %s195 = smul.addr %s191, 16
      %s196 = sadd.s32 %s194, %s195
      %s197 = smul.addr %s196, 2
      %s198 = scalar_lea.vmem %s2, %s197
      %s199 = smul.u32 8, %s17
      %v200 = vld [vmem:[%s184] sm:$0xff]
      %v201 = vld [vmem:[%s184 + $0x8] sm:$0xff]
      %v202 = vld [vmem:[%s188] sm:$0xff]
      %s203 = scalar_lea.vmem %s188, 8
      %v204 = vld [vmem:[%s203] sm:$0xff]
      %s205 = scalar_lea.vmem %s188, 16
      %v206 = vld [vmem:[%s205] sm:$0xff]
      %vm207 = vcmask 556032
      %v208 = vsel %vm207, %v201, 0.0
      %v209 = vadd.f32 %v200, %v208
      %210 = vadd.xlane.f32.xlu0 %v209
      %v211 = vpop.xlane.xlu0 %210
      %v212 = vmul.f32 %v211, 0.0051020407
      %v213 = vmul.f32 %v200, %v200
      %v214 = vmul.f32 %v201, %v201
      %v215 = vsel %vm207, %v214, 0.0
      %v216 = vadd.f32 %v213, %v215
      %217 = vadd.xlane.f32.xlu0 %v216
      %v218 = vpop.xlane.xlu0 %217
      %v219 = vmul.f32 %v218, 0.0051020407
      %v220 = vmul.f32 %v212, %v212
      %v221 = vsub.f32 %v219, %v220
      %v222 = vmax.f32 %v221, 0.0
      %v223 = vadd.f32 %v222, 1e-05
      %v224 = vrsqrt.pop %v223
      %v225 = vmul.f32 %v202, %v224
      %v226 = vsub.f32 %v204, %v225
      %v227 = vmul.f32 %v226, %v212
      %v228 = vadd.f32 %v227, %v206
      %230 = vset.pattern.permute.xlu0 0
      %231 = vperm.xlu0 %230, %v225
      %v232 = vpop.permute.xlu0 %231
      %v234 = vmul.f32 %v232, %v200
      %v235 = vmul.f32 %v232, %v201
      %237 = vset.pattern.permute.xlu0 0
      %238 = vperm.xlu0 %237, %v228
      %v239 = vpop.permute.xlu0 %238
      %v241 = vadd.f32 %v234, %v239
      %v242 = vadd.f32 %v235, %v239
      %v243 = vxor.u32 %v241, 2147483648
      %v244 = vxor.u32 %v242, 2147483648
      %v245 = vmul.f32 %v243, 1.442695
      %v246 = vpow.pop %v245
      %v247 = vmul.f32 %v244, 1.442695
      %v248 = vpow.pop %v247
      %v249 = vadd.f32 %v246, 1.0
      %v250 = vadd.f32 %v248, 1.0
      %v251 = vrcp.pop %v249
      %v252 = vmul.f32 1.0, %v251
      %v253 = vrcp.pop %v250
      %v254 = vmul.f32 1.0, %v253
      %v255 = vmul.f32 %v200, %v252
      %v256 = vmul.f32 %v201, %v254
      %v259 = vcombine.low %v255, %v256
      %v260 = vcombine.high %v255, %v256
      %v262 = vunpack.c.l.s4 1966171168
      %v263 = vunpack.c.0.s8 %v262
      %v264 = vlaneseq
      %v265 = vshrl.u32 %v264, 7
      %v266 = vsub.s32 %v263, %v265
      %v267 = vrot.slane %v259, %v266
      %v269 = vunpack.c.l.s4 1966171168
      %v270 = vunpack.c.0.s8 %v269
      %v271 = vlaneseq
      %v272 = vshrl.u32 %v271, 7
      %v273 = vsub.s32 %v270, %v272
      %v274 = vrot.slane %v260, %v273
      %v275 = vcombine.high %v267, %v267
      %v276 = vcombine.high %v274, %v274
      %v278 = vunpack.c.l.s4 1966171168
      %v279 = vunpack.c.0.s8 %v278
      %v280 = vlaneseq
      %v281 = vshrl.u32 %v280, 7
      %v282 = vsub.s32 %v279, %v281
      %v283 = vrot.slane %v267, %v282
      %v285 = vunpack.c.l.s4 1966171168
      %v286 = vunpack.c.0.s8 %v285
      %v287 = vlaneseq
      %v288 = vshrl.u32 %v287, 7
      %v289 = vsub.s32 %v286, %v288
      %v290 = vrot.slane %v274, %v289
      %v292 = vunpack.c.l.s4 1966171168
      %v293 = vunpack.c.0.s8 %v292
      %v294 = vlaneseq
      %v295 = vshrl.u32 %v294, 7
      %v296 = vsub.s32 %v293, %v295
      %v297 = vrot.slane %v275, %v296
      %v299 = vunpack.c.l.s4 1966171168
      %v300 = vunpack.c.0.s8 %v299
      %v301 = vlaneseq
      %v302 = vshrl.u32 %v301, 7
      %v303 = vsub.s32 %v300, %v302
      %v304 = vrot.slane %v276, %v303
      %v305 = vcombine.high %v283, %v283
      %v306 = vcombine.high %v290, %v290
      %v307 = vcombine.high %v297, %v297
      %v308 = vcombine.high %v304, %v304
      %v317 = vlaneseq
      %vm318 = vcmp.ge.s32.totalorder %v317, 0
      %vm319 = vcmp.lt.s32.totalorder %v317, 196
      %vm320 = vmand %vm318, %vm319
      %321 = vst.msk [vmem:[%s198] ss:$2 sm:$0x3] %vm320, %v283
      %s322 = scalar_lea.vmem %s198, 4
      %323 = vst.msk [vmem:[%s322] ss:$2 sm:$0x3] %vm320, %v297
      %s324 = scalar_lea.vmem %s198, 8
      %325 = vst.msk [vmem:[%s324] ss:$2 sm:$0x3] %vm320, %v305
      %s326 = scalar_lea.vmem %s198, 12
      %327 = vst.msk [vmem:[%s326] ss:$2 sm:$0x3] %vm320, %v307
      %s328 = scalar_lea.vmem %s198, 16
      %329 = vst.msk [vmem:[%s328] ss:$2 sm:$0x3] %vm320, %v290
      %s330 = scalar_lea.vmem %s198, 20
      %331 = vst.msk [vmem:[%s330] ss:$2 sm:$0x3] %vm320, %v304
      %s332 = scalar_lea.vmem %s198, 24
      %333 = vst.msk [vmem:[%s332] ss:$2 sm:$0x3] %vm320, %v306
      %s334 = scalar_lea.vmem %s198, 28
      %335 = vst.msk [vmem:[%s334] ss:$2 sm:$0x3] %vm320, %v308
      %s336 = scalar_lea.vmem %s184, 16
      %v337 = vld [vmem:[%s336] sm:$0xff]
      %v338 = vld [vmem:[%s336 + $0x8] sm:$0xff]
      %s339 = scalar_lea.vmem %s188, 24
      %v340 = vld [vmem:[%s339] sm:$0xff]
      %s341 = scalar_lea.vmem %s188, 32
      %v342 = vld [vmem:[%s341] sm:$0xff]
      %s343 = scalar_lea.vmem %s188, 40
      %v344 = vld [vmem:[%s343] sm:$0xff]
      %v345 = vsel %vm207, %v338, 0.0
      %v346 = vadd.f32 %v337, %v345
      %347 = vadd.xlane.f32.xlu0 %v346
      %v348 = vpop.xlane.xlu0 %347
      %v349 = vmul.f32 %v348, 0.0051020407
      %v350 = vmul.f32 %v337, %v337
      %v351 = vmul.f32 %v338, %v338
      %v352 = vsel %vm207, %v351, 0.0
      %v353 = vadd.f32 %v350, %v352
      %354 = vadd.xlane.f32.xlu0 %v353
      %v355 = vpop.xlane.xlu0 %354
      %v356 = vmul.f32 %v355, 0.0051020407
      %v357 = vmul.f32 %v349, %v349
      %v358 = vsub.f32 %v356, %v357
      %v359 = vmax.f32 %v358, 0.0
      %v360 = vadd.f32 %v359, 1e-05
      %v361 = vrsqrt.pop %v360
      %v362 = vmul.f32 %v340, %v361
      %v363 = vsub.f32 %v342, %v362
      %v364 = vmul.f32 %v363, %v349
      %v365 = vadd.f32 %v364, %v344
      %367 = vset.pattern.permute.xlu0 0
      %368 = vperm.xlu0 %367, %v362
      %v369 = vpop.permute.xlu0 %368
      %v371 = vmul.f32 %v369, %v337
      %v372 = vmul.f32 %v369, %v338
      %374 = vset.pattern.permute.xlu0 0
      %375 = vperm.xlu0 %374, %v365
      %v376 = vpop.permute.xlu0 %375
      %v378 = vadd.f32 %v371, %v376
      %v379 = vadd.f32 %v372, %v376
      %v380 = vxor.u32 %v378, 2147483648
      %v381 = vxor.u32 %v379, 2147483648
      %v382 = vmul.f32 %v380, 1.442695
      %v383 = vpow.pop %v382
      %v384 = vmul.f32 %v381, 1.442695
      %v385 = vpow.pop %v384
      %v386 = vadd.f32 %v383, 1.0
      %v387 = vadd.f32 %v385, 1.0
      %v388 = vrcp.pop %v386
      %v389 = vmul.f32 1.0, %v388
      %v390 = vrcp.pop %v387
      %v391 = vmul.f32 1.0, %v390
      %v392 = vmul.f32 %v337, %v389
      %v393 = vmul.f32 %v338, %v391
      %v396 = vcombine.low %v392, %v393
      %v397 = vcombine.high %v392, %v393
      %v399 = vunpack.c.l.s4 1966171168
      %v400 = vunpack.c.0.s8 %v399
      %v401 = vlaneseq
      %v402 = vshrl.u32 %v401, 7
      %v403 = vsub.s32 %v400, %v402
      %v404 = vrot.slane %v396, %v403
      %v406 = vunpack.c.l.s4 1966171168
      %v407 = vunpack.c.0.s8 %v406
      %v408 = vlaneseq
      %v409 = vshrl.u32 %v408, 7
      %v410 = vsub.s32 %v407, %v409
      %v411 = vrot.slane %v397, %v410
      %v412 = vcombine.high %v404, %v404
      %v413 = vcombine.high %v411, %v411
      %v415 = vunpack.c.l.s4 1966171168
      %v416 = vunpack.c.0.s8 %v415
      %v417 = vlaneseq
      %v418 = vshrl.u32 %v417, 7
      %v419 = vsub.s32 %v416, %v418
      %v420 = vrot.slane %v404, %v419
      %v422 = vunpack.c.l.s4 1966171168
      %v423 = vunpack.c.0.s8 %v422
      %v424 = vlaneseq
      %v425 = vshrl.u32 %v424, 7
      %v426 = vsub.s32 %v423, %v425
      %v427 = vrot.slane %v411, %v426
      %v429 = vunpack.c.l.s4 1966171168
      %v430 = vunpack.c.0.s8 %v429
      %v431 = vlaneseq
      %v432 = vshrl.u32 %v431, 7
      %v433 = vsub.s32 %v430, %v432
      %v434 = vrot.slane %v412, %v433
      %v436 = vunpack.c.l.s4 1966171168
      %v437 = vunpack.c.0.s8 %v436
      %v438 = vlaneseq
      %v439 = vshrl.u32 %v438, 7
      %v440 = vsub.s32 %v437, %v439
      %v441 = vrot.slane %v413, %v440
      %v442 = vcombine.high %v420, %v420
      %v443 = vcombine.high %v427, %v427
      %v444 = vcombine.high %v434, %v434
      %v445 = vcombine.high %v441, %v441
      %s454 = scalar_lea.vmem %s198, 1
      %455 = vst.msk [vmem:[%s454] ss:$2 sm:$0x3] %vm320, %v420
      %s456 = scalar_lea.vmem %s198, 5
      %457 = vst.msk [vmem:[%s456] ss:$2 sm:$0x3] %vm320, %v434
      %s458 = scalar_lea.vmem %s198, 9
      %459 = vst.msk [vmem:[%s458] ss:$2 sm:$0x3] %vm320, %v442
      %s460 = scalar_lea.vmem %s198, 13
      %461 = vst.msk [vmem:[%s460] ss:$2 sm:$0x3] %vm320, %v444
      %s462 = scalar_lea.vmem %s198, 17
      %463 = vst.msk [vmem:[%s462] ss:$2 sm:$0x3] %vm320, %v427
      %s464 = scalar_lea.vmem %s198, 21
      %465 = vst.msk [vmem:[%s464] ss:$2 sm:$0x3] %vm320, %v441
      %s466 = scalar_lea.vmem %s198, 25
      %467 = vst.msk [vmem:[%s466] ss:$2 sm:$0x3] %vm320, %v443
      %s468 = scalar_lea.vmem %s198, 29
      %469 = vst.msk [vmem:[%s468] ss:$2 sm:$0x3] %vm320, %v445
      %s470 = smul.u32 8, %s17
      %p471 = scmp.lt.s32.totalorder %s18, 1
      %s472 = scalar_select %p471, %s18, 1
      %p473 = scmp.lt.s32.totalorder %s470, 7
      %s474 = scalar_select %p473, %s470, 7
      %s475 = smul.addr %s474, 2
      %s476 = smul.addr %s472, 16
      %s477 = sadd.s32 %s475, %s476
      %s478 = smul.addr %s477, 2
      %s479 = scalar_lea.vmem %s2, %s478
      // Predicated region
      $region29: #{sa_layer_forward.1} parent=27 // pred_check
        %p480 = pneg %p99
      $region30: #{sa_layer_forward.1} parent=27 // pred_check_branch
        %482 = sbr.rel (%p480) target = $region32
      $region31: #{sa_layer_forward.1} parent=27 // pred_region
        %s483 = smul.u32 8, %s17
      $region32: #{sa_layer_forward.1} parent=27 // pred_fallthru
        _
    $region28: #{sa_layer_forward.1} parent=5 // pred_fallthru
      _
    %p484 = scmp.le.s32.totalorder 2, %s8
    // Predicated region
    $region33: #{sa_layer_forward.1} parent=5 // pred_check
      %p485 = pneg %p484
    $region34: #{sa_layer_forward.1} parent=5 // pred_check_branch
      %487 = sbr.rel (%p485) target = $region36
    $region35: #{sa_layer_forward.1} parent=5 // pred_region
      %s488 = ssub.s32 %s8, 2
      // Predicated region
      $region37: #{sa_layer_forward.1} parent=35 // pred_check
        %p489 = pneg %p105
      $region38: #{sa_layer_forward.1} parent=35 // pred_check_branch
        %491 = sbr.rel (%p489) target = $region40
      $region39: #{sa_layer_forward.1} parent=35 // pred_region
        %s492 = smul.u32 8, %s19
        %p493 = scmp.lt.s32.totalorder %s20, 1
        %s494 = scalar_select %p493, %s20, 1
        %p495 = scmp.lt.s32.totalorder %s492, 7
        %s496 = scalar_select %p495, %s492, 7
        %s497 = smul.addr %s496, 2
        %s498 = smul.addr %s494, 16
        %s499 = sadd.s32 %s497, %s498
        %s500 = smul.addr %s499, 2
        %s501 = scalar_lea.vmem %s2, %s500
      $region40: #{sa_layer_forward.1} parent=35 // pred_fallthru
        _
    $region36: #{sa_layer_forward.1} parent=5 // pred_fallthru
      _
  $region6: #{sa_layer_forward.1} parent=0 // loop_footer
    %s12 = sadd.s32 1, %s8
  $region7: #{sa_layer_forward.1} parent=0 // loop_footer_branch
    %7 = sbr.rel target = $region3
  $region8: #{sa_layer_forward.1} parent=0 // loop_exit
    _

</llo_original>
